<compile_context>
chip_gen: v5e
topology: v5e:2x2
jax: 0.10.0
libtpu: 0.0.40
codegen_flags: <defaults>
</compile_context>

<pallas_src>
import functools

import jax
import jax.numpy as jnp
from jax.experimental import pallas as pl
from jax.experimental.pallas import tpu as pltpu


# ------------------------------------------------------------------------------------
# Tile / VMEM sizing helpers
# ------------------------------------------------------------------------------------
_STEP_BUDGET_BYTES = 20 << 20  # per-step working-set target; safe under v7x scoped VMEM


def _pick_seq_tile(S, row_bytes, budget_bytes=_STEP_BUDGET_BYTES):
    """Largest seq tile (divisor of S, multiple of 8, preferring >=128) fitting budget."""
    cap = max(8, budget_bytes // max(row_bytes, 1))
    if S <= cap:
        return S
    for step in (512, 256, 128, 64, 32, 16, 8):
        if step > cap:
            continue
        best, d = 0, step
        while d <= cap:
            if S % d == 0:
                best = d
            d += step
        if best:
            return best
    return S  # full extent is always a legal block shape


def _pick_hidden_tile(H, cap=2048):
    """Hidden tile (NONE path only): largest multiple of 128 dividing H, else full H."""
    if H <= cap or H % 128 != 0:
        return H
    best, d = H, 128
    while d <= cap:
        if H % d == 0:
            best = d
        d += 128
    return best if best <= cap else H


def _vmem_limit_bytes(per_step_bytes, scratch_bytes):
    # double-buffered pipeline buffers + resident scratch + headroom, capped for v7x.
    need = 2 * per_step_bytes + scratch_bytes + (4 << 20)
    return int(min(max(need, 16 << 20), 48 << 20))


# ------------------------------------------------------------------------------------
# Kernels
# ------------------------------------------------------------------------------------
def _allreduce_kernel(x_ref, o_ref, acc_ref):
    # grid = (seq_blocks, hidden_blocks, tp); tp is the reduction ("arbitrary") axis.
    # x_ref: (1, tq, th) -> one rank's shard; acc_ref: (tq, th) f32 scratch.
    k = pl.program_id(2)
    part = x_ref[0].astype(jnp.float32)

    @pl.when(k == 0)
    def _():
        acc_ref[...] = part

    @pl.when(k != 0)
    def _():
        acc_ref[...] += part

    @pl.when(k == pl.num_programs(2) - 1)
    def _():
        o_ref[...] = acc_ref[...].astype(o_ref.dtype)


def _allreduce_residual_rmsnorm_kernel(*refs, eps, has_bias):
    # grid = (seq_blocks, tp); tp is the reduction ("arbitrary") axis.
    if has_bias:
        x_ref, res_ref, w_ref, bias_ref, norm_ref, res_out_ref, acc_ref = refs
    else:
        x_ref, res_ref, w_ref, norm_ref, res_out_ref, acc_ref = refs
        bias_ref = None

    k = pl.program_id(1)
    part = x_ref[0].astype(jnp.float32)

    @pl.when(k == 0)
    def _():
        acc_ref[...] = part

    @pl.when(k != 0)
    def _():
        acc_ref[...] += part

    @pl.when(k == pl.num_programs(1) - 1)
    def _():
        inter = acc_ref[...] + res_ref[...].astype(jnp.float32)     # + residual
        if bias_ref is not None:                                    # + bias (only if present)
            inter = inter + bias_ref[...].astype(jnp.float32)
        var = jnp.mean(inter * inter, axis=-1, keepdims=True)       # RMS statistic (f32)
        inv = jax.lax.rsqrt(var + eps)                              # EUP
        norm = inter * inv * w_ref[...].astype(jnp.float32)         # * norm_weight
        norm_ref[...] = norm.astype(norm_ref.dtype)
        res_out_ref[...] = inter.astype(res_out_ref.dtype)


# ------------------------------------------------------------------------------------
# Wrappers (pallas_call plumbing)
# ------------------------------------------------------------------------------------
def allreduce_none(x, *, tq=None, th=None):
    """x: [tp, S, H] -> [S, H]  (plain all-reduce, fusion_op = NONE)."""
    tp, S, H = x.shape
    eb = jnp.dtype(x.dtype).itemsize
    if th is None:
        th = _pick_hidden_tile(H)
    if tq is None:
        # per row: x block + out block (double-buffered by the pipeline) + f32 scratch
        row_bytes = th * (2 * eb + 2 * eb + 4)
        tq = _pick_seq_tile(S, row_bytes)
    assert S % tq == 0 and H % th == 0

    per_step = tq * th * eb * 2          # x block + out block
    scratch = tq * th * 4                # f32 accumulator
    cost = pl.CostEstimate(flops=int(tp * S * H),
                           transcendentals=0,
                           bytes_accessed=int((tp + 1) * S * H * eb))

    return pl.pallas_call(
        _allreduce_kernel,
        out_shape=jax.ShapeDtypeStruct((S, H), x.dtype),
        grid_spec=pltpu.PrefetchScalarGridSpec(
            num_scalar_prefetch=0,
            grid=(S // tq, H // th, tp),
            in_specs=[pl.BlockSpec((1, tq, th), lambda i, j, k: (k, i, j))],
            out_specs=pl.BlockSpec((tq, th), lambda i, j, k: (i, j)),
            scratch_shapes=[pltpu.VMEM((tq, th), jnp.float32)],
        ),
        compiler_params=pltpu.CompilerParams(
            dimension_semantics=("parallel", "parallel", "arbitrary"),
            vmem_limit_bytes=_vmem_limit_bytes(per_step, scratch)),
        cost_estimate=cost,
    )(x)


def allreduce_residual_rmsnorm(x, residual, norm_weight, bias=None, *, eps=1e-6, tq=None):
    """x: [tp, S, H], residual: [S, H], norm_weight: [H], bias: [H] or None.
    Returns (norm, residual_out) — matches RESIDUAL_RMS_NORM fusion output list."""
    tp, S, H = x.shape
    assert residual.shape == (S, H) and norm_weight.shape == (H,)
    eb = jnp.dtype(x.dtype).itemsize
    has_bias = bias is not None
    if tq is None:
        # per row: x + residual + 2 outputs (double-buffered) + f32 scratch
        row_bytes = H * (2 * eb + 2 * eb + 4 * eb + 4)
        tq = _pick_seq_tile(S, row_bytes)
    assert S % tq == 0

    w2 = norm_weight.reshape(1, H)
    args = [x, residual, w2]
    in_specs = [pl.BlockSpec((1, tq, H), lambda i, k: (k, i, 0)),
                pl.BlockSpec((tq, H), lambda i, k: (i, 0)),
                pl.BlockSpec((1, H), lambda i, k: (0, 0))]
    if has_bias:
        args.append(jnp.asarray(bias).reshape(1, H).astype(x.dtype))
        in_specs.append(pl.BlockSpec((1, H), lambda i, k: (0, 0)))

    kernel = functools.partial(_allreduce_residual_rmsnorm_kernel, eps=eps, has_bias=has_bias)

    per_step = tq * H * eb * 4 + H * eb * (2 if has_bias else 1)
    scratch = tq * H * 4
    cost = pl.CostEstimate(flops=int((tp + 6) * S * H),
                           transcendentals=int(S),
                           bytes_accessed=int((tp + 3) * S * H * eb + H * eb))

    return pl.pallas_call(
        kernel,
        out_shape=(jax.ShapeDtypeStruct((S, H), x.dtype),
                   jax.ShapeDtypeStruct((S, H), x.dtype)),
        grid_spec=pltpu.PrefetchScalarGridSpec(
            num_scalar_prefetch=0,
            grid=(S // tq, tp),
            in_specs=in_specs,
            out_specs=[pl.BlockSpec((tq, H), lambda i, k: (i, 0)),
                       pl.BlockSpec((tq, H), lambda i, k: (i, 0))],
            scratch_shapes=[pltpu.VMEM((tq, H), jnp.float32)],
        ),
        compiler_params=pltpu.CompilerParams(
            dimension_semantics=("parallel", "arbitrary"),
            vmem_limit_bytes=_vmem_limit_bytes(per_step, scratch)),
        cost_estimate=cost,
    )(*args)


# ------------------------------------------------------------------------------------
# Module-like wrapper mirroring AllReduce.forward
# ------------------------------------------------------------------------------------
class AllReducePallas:
    """Mirrors tensorrt_llm AllReduce: tp_size==1 -> identity; otherwise reduce (+ optional fusion)."""

    def __init__(self, tp_size: int):
        self.tp_size = tp_size
        # TODO(synk): IPC workspace / NCCL / UB / LOWPRECISION strategy selection have no
        # single-host Pallas equivalent; the reduction itself is implemented in-kernel.

    def __call__(self, per_rank_input, *, residual=None, norm_weight=None,
                 bias=None, eps=1e-6, fusion_op="NONE"):
        if self.tp_size == 1:
            # forward() returns the input unchanged when tp_size == 1
            return per_rank_input[0]
        if fusion_op == "NONE":
            return allreduce_none(per_rank_input)
        elif fusion_op == "RESIDUAL_RMS_NORM":
            return allreduce_residual_rmsnorm(per_rank_input, residual, norm_weight,
                                              bias=bias, eps=eps)
        else:
            # TODO(synk): RESIDUAL_RMS_NORM_QUANT_FP8 / NVFP4 fusions not implemented.
            raise NotImplementedError(fusion_op)


# ------------------------------------------------------------------------------------
# References (pure JAX) for correctness checking
# ------------------------------------------------------------------------------------
def _ref_allreduce(x):
    return jnp.sum(x.astype(jnp.float32), axis=0).astype(x.dtype)


def _ref_allreduce_rmsnorm(x, residual, w, eps, bias=None):
    reduced = jnp.sum(x.astype(jnp.float32), axis=0)
    inter = reduced + residual.astype(jnp.float32)
    if bias is not None:
        inter = inter + bias.astype(jnp.float32)
    var = jnp.mean(inter * inter, axis=-1, keepdims=True)
    norm = inter * jax.lax.rsqrt(var + eps) * w.astype(jnp.float32)
    return norm.astype(x.dtype), inter.astype(x.dtype)


def _close(a, b):
    return jnp.allclose(a.astype(jnp.float32), b.astype(jnp.float32), atol=1e-1, rtol=1e-2)


if __name__ == "__main__":
    key = jax.random.PRNGKey(0)

    # --- Small case through the module wrapper ---------------------------------------
    tp_size, seq, hidden = 4, 16, 32
    k1, k2, k3, k4 = jax.random.split(key, 4)
    x = jax.random.normal(k1, (tp_size, seq, hidden), dtype=jnp.float32).astype(jnp.bfloat16)
    residual = jax.random.normal(k2, (seq, hidden), dtype=jnp.float32).astype(jnp.bfloat16)
    norm_weight = (1.0 + 0.01 * jnp.arange(hidden, dtype=jnp.float32)).astype(jnp.bfloat16)

    module = AllReducePallas(tp_size=tp_size)

    out_none = jax.block_until_ready(module(x, fusion_op="NONE"))
    assert out_none.shape == (seq, hidden) and out_none.dtype == x.dtype
    assert _close(out_none, _ref_allreduce(x))

    norm_out, res_out = module(x, residual=residual, norm_weight=norm_weight,
                               eps=1e-6, fusion_op="RESIDUAL_RMS_NORM")
    norm_out = jax.block_until_ready(norm_out)
    res_out = jax.block_until_ready(res_out)
    ref_norm, ref_res = _ref_allreduce_rmsnorm(x, residual, norm_weight, 1e-6)
    assert _close(norm_out, ref_norm) and _close(res_out, ref_res)

    # --- Tiled case (exercises multi-step grid + accumulator + bias path) ------------
    tp2, S2, H2 = 2, 256, 256
    k5, k6, k7 = jax.random.split(k4, 3)
    x2 = jax.random.normal(k5, (tp2, S2, H2), dtype=jnp.float32).astype(jnp.bfloat16)
    res2 = jax.random.normal(k6, (S2, H2), dtype=jnp.float32).astype(jnp.bfloat16)
    w2 = (1.0 + 0.001 * jnp.arange(H2, dtype=jnp.float32)).astype(jnp.bfloat16)
    b2 = (0.01 * jax.random.normal(k7, (H2,), dtype=jnp.float32)).astype(jnp.bfloat16)

    out2 = jax.block_until_ready(allreduce_none(x2, tq=128, th=128))
    assert _close(out2, _ref_allreduce(x2))

    n2, r2 = allreduce_residual_rmsnorm(x2, res2, w2, bias=b2, eps=1e-6, tq=128)
    n2 = jax.block_until_ready(n2)
    r2 = jax.block_until_ready(r2)
    ref_n2, ref_r2 = _ref_allreduce_rmsnorm(x2, res2, w2, 1e-6, bias=b2)
    assert _close(n2, ref_n2) and _close(r2, ref_r2)

    print("KERNEL_OK")
</pallas_src>

<mosaic_0001>
module attributes {stable_mosaic.version = 11 : i64} {
  func.func @_allreduce_kernel(%arg0: i32, %arg1: i32, %arg2: i32, %arg3: memref<1x16x32xbf16, #tpu.memory_space<vmem>>, %arg4: memref<16x32xbf16, #tpu.memory_space<vmem>>, %arg5: memref<16x32xf32, #tpu.memory_space<vmem>>) attributes {dimension_semantics = [#tpu.dimension_semantics<parallel>, #tpu.dimension_semantics<parallel>, #tpu.dimension_semantics<arbitrary>], iteration_bounds = array<i64: 1, 1, 4>, scalar_prefetch = 0 : i64, scratch_operands = 1 : i64, tpu.core_type = #tpu.core_type<tc>, window_params = [{transform_indices = @transform_0, window_bounds = array<i64: 1, 16, 32>}, {transform_indices = @transform_1, window_bounds = array<i64: 16, 32>}]} {
    %c0 = arith.constant 0 : index
    %c0_0 = arith.constant 0 : index
    %c0_1 = arith.constant 0 : index
    %0 = vector.load %arg3[%c0, %c0_0, %c0_1] : memref<1x16x32xbf16, #tpu.memory_space<vmem>>, vector<1x16x32xbf16>
    %1 = vector.shape_cast %0 : vector<1x16x32xbf16> to vector<16x32xbf16>
    %2 = arith.extf %1 : vector<16x32xbf16> to vector<16x32xf32>
    %c0_i32 = arith.constant 0 : i32
    %3 = arith.cmpi eq, %arg2, %c0_i32 : i32
    %4 = arith.extui %3 : i1 to i32
    %c0_i32_2 = arith.constant 0 : i32
    %5 = arith.cmpi ne, %4, %c0_i32_2 : i32
    scf.if %5 {
      %c0_6 = arith.constant 0 : index
      %c0_7 = arith.constant 0 : index
      %12 = vector.load %arg5[%c0_6, %c0_7] : memref<16x32xf32, #tpu.memory_space<vmem>>, vector<16x32xf32>
      tpu.vector_store %arg5[%c0_6, %c0_7], %2 {strides = array<i32>} : memref<16x32xf32, #tpu.memory_space<vmem>>, vector<16x32xf32>,
    } else {
    }
    %c0_i32_3 = arith.constant 0 : i32
    %6 = arith.cmpi ne, %arg2, %c0_i32_3 : i32
    %7 = arith.extui %6 : i1 to i32
    %c0_i32_4 = arith.constant 0 : i32
    %8 = arith.cmpi ne, %7, %c0_i32_4 : i32
    scf.if %8 {
      %c0_6 = arith.constant 0 : index
      %c0_7 = arith.constant 0 : index
      %12 = vector.load %arg5[%c0_6, %c0_7] : memref<16x32xf32, #tpu.memory_space<vmem>>, vector<16x32xf32>
      %13 = arith.addf %12, %2 : vector<16x32xf32>
      %c0_8 = arith.constant 0 : index
      %c0_9 = arith.constant 0 : index
      %14 = vector.load %arg5[%c0_8, %c0_9] : memref<16x32xf32, #tpu.memory_space<vmem>>, vector<16x32xf32>
      tpu.vector_store %arg5[%c0_8, %c0_9], %13 {strides = array<i32>} : memref<16x32xf32, #tpu.memory_space<vmem>>, vector<16x32xf32>,
    } else {
    }
    %c3_i32 = arith.constant 3 : i32
    %9 = arith.cmpi eq, %arg2, %c3_i32 : i32
    %10 = arith.extui %9 : i1 to i32
    %c0_i32_5 = arith.constant 0 : i32
    %11 = arith.cmpi ne, %10, %c0_i32_5 : i32
    scf.if %11 {
      %c0_6 = arith.constant 0 : index
      %c0_7 = arith.constant 0 : index
      %12 = vector.load %arg5[%c0_6, %c0_7] : memref<16x32xf32, #tpu.memory_space<vmem>>, vector<16x32xf32>
      %13 = arith.truncf %12 : vector<16x32xf32> to vector<16x32xbf16>
      %c0_8 = arith.constant 0 : index
      %c0_9 = arith.constant 0 : index
      %14 = vector.load %arg4[%c0_8, %c0_9] : memref<16x32xbf16, #tpu.memory_space<vmem>>, vector<16x32xbf16>
      tpu.vector_store %arg4[%c0_8, %c0_9], %13 {strides = array<i32>} : memref<16x32xbf16, #tpu.memory_space<vmem>>, vector<16x32xbf16>,
    } else {
    }
    return
  }
  func.func @transform_0(%arg0: i32, %arg1: i32, %arg2: i32) -> (i32, i32, i32) {
    %c0_i32 = arith.constant 0 : i32
    return %arg2, %arg0, %arg1 : i32, i32, i32
  }
  func.func @transform_1(%arg0: i32, %arg1: i32, %arg2: i32) -> (i32, i32) {
    %c0_i32 = arith.constant 0 : i32
    return %arg0, %arg1 : i32, i32
  }
}

</mosaic_0001>

<llo_original>
// kernel: tpu_custom_call.1
$region0: #{tpu_custom_call.1}
  #allocation0 [shape = 'u32[]', space=smem, size = 0x4, offset = 0x4, fixed_abs, tag = 'smem constant byte address 0x4 - core index']
  #allocation1 [shape = 'u32[72,128]{1,0:T(1,128)}', space=vmem, size = 0x9000, scoped, tag = 'internal scratch']
  #allocation2 [shape = 'f32[16,32]{1,0:T(8,128)}', space=vmem, size = 0x2000, scoped, tag = 'scratch operand']
  %s0 = inlined_call_operand.hbm [shape: bf16[4,16,32], index: 0, kind: input, shape index: {}]
  %s1 = inlined_call_operand.hbm [shape: bf16[16,32], index: 1, kind: output, shape index: {}]
  %s2 = sld [smem:[#allocation0]]
  $region53: #{tpu_custom_call.1} parent=0
    _
  %s4 = ssub.s32 1, %s2
  %s5 = scalar_select 0, %s4, %s2
  $region1: #{tpu_custom_call.1} parent=0
    #allocation3 [shape = 'u8[8192]{0}', space=vmem, size = 0x2000, scoped, tag = 'input window, operand 0']
    #allocation4 [shape = 's32[2]{0}', space=sflag, size = 0x8, scoped, tag = 'scoped memory for tpu_custom_call.1']
    #allocation5 [shape = 's32[2]{0}', space=sflag, size = 0x8, scoped, tag = 'scoped memory for tpu_custom_call.1']
    #allocation6 [shape = 'u8[4096]{0}', space=vmem, size = 0x1000, scoped, tag = 'output window, operand 0, single buffered']
    %6 = vsyncpa [#allocation4], 0
    %s7 = scalar_lea.sflag [#allocation4], 1
    %8 = vsyncpa %s7, 0
    %9 = vsyncpa [#allocation5], 0
    loop: start=0, step=1, limit=6
    $region2: #{tpu_custom_call.1} parent=1 // loop_pre_header
      _
    $region3: #{tpu_custom_call.1} parent=1 // loop_header
      %s11 = sphi 0, %s15
      %p12 = scmp.ge.s32.totalorder %s11, 6
      %s18 = sphi 0, %s37
      %s19 = sphi 0, %s33
      %s20 = sphi 0, %s29
      %s21 = sphi 0, %s18
      %s22 = sphi 0, %s19
      %s23 = sphi 0, %s20
      %s24 = sphi 0, %s21
      %s25 = sphi 0, %s22
      %s26 = sphi 0, %s23
      %s44 = sphi 0, %s46
      %s47 = sphi 0, %s44
      %s48 = sphi 0, %s47
      %s64 = sphi 0, %s48
      %s72 = sphi 0, %s74
      %s75 = sphi 0, %s72
      %s76 = sphi 0, %s75
      %s92 = sphi 0, %s76
    $region4: #{tpu_custom_call.1} parent=1 // loop_header_branch
      %14 = sbr.rel (%p12) target = $region8
    $region5: #{tpu_custom_call.1} parent=1 // loop_body
      %s16 = ssub.s32 %s11, 1
      %s17 = ssub.s32 %s11, 2
      %s27 = sadd.s32 1, %s20
      %p28 = scmp.ge.s32.totalorder %s27, 4
      %s29 = scalar_select %p28, 0, %s27
      %s30 = sadd.s32 1, %s19
      %s31 = scalar_select %p28, %s30, %s19
      %p32 = scmp.ge.s32.totalorder %s31, 1
      %s33 = scalar_select %p32, 0, %s31
      %s34 = sadd.s32 1, %s18
      %s35 = scalar_select %p32, %s34, %s18
      %p36 = scmp.ge.s32.totalorder %s35, 1
      %s37 = scalar_select %p36, 0, %s35
      %s38 = ssub.s32 %s20, %s29
      %s39 = ssub.s32 %s18, %s37
      %s40 = sor.u32 %s38, %s39
      %s41 = ssub.s32 %s19, %s33
      %s42 = sor.u32 %s40, %s41
      %p43 = scmp.eq.s32.totalorder %s42, 0
      %s45 = sadd.s32 %s44, 1
      %s46 = scalar_select %p43, %s44, %s45
      %p49 = pneg %p43
      %p50 = scmp.eq.s32.totalorder %s11, 3
      %p51 = por %p49, %p50
      %p52 = scmp.ne.s32.totalorder %s44, %s47
      %p53 = scmp.eq.s32.totalorder %s11, 0
      %p54 = por %p52, %p53
      %p55 = scmp.ne.s32.totalorder %s44, %s47
      %p56 = scmp.eq.s32.totalorder %s16, 3
      %p57 = por %p55, %p56
      %p58 = scmp.ne.s32.totalorder %s47, %s48
      %p59 = scmp.eq.s32.totalorder %s16, 0
      %p60 = por %p58, %p59
      %p61 = scmp.ne.s32.totalorder %s47, %s48
      %p62 = scmp.eq.s32.totalorder %s17, 3
      %p63 = por %p61, %p62
      %p65 = scmp.ne.s32.totalorder %s48, %s64
      %p66 = scmp.eq.s32.totalorder %s17, 0
      %p67 = por %p65, %p66
      %s68 = ssub.s32 %s18, %s37
      %s69 = ssub.s32 %s19, %s33
      %s70 = sor.u32 %s68, %s69
      %p71 = scmp.eq.s32.totalorder %s70, 0
      %s73 = sadd.s32 %s72, 1
      %s74 = scalar_select %p71, %s72, %s73
      %p77 = pneg %p71
      %p78 = scmp.eq.s32.totalorder %s11, 3
      %p79 = por %p77, %p78
      %p80 = scmp.ne.s32.totalorder %s72, %s75
      %p81 = scmp.eq.s32.totalorder %s11, 0
      %p82 = por %p80, %p81
      %p83 = scmp.ne.s32.totalorder %s72, %s75
      %p84 = scmp.eq.s32.totalorder %s16, 3
      %p85 = por %p83, %p84
      %p86 = scmp.ne.s32.totalorder %s75, %s76
      %p87 = scmp.eq.s32.totalorder %s16, 0
      %p88 = por %p86, %p87
      %p89 = scmp.ne.s32.totalorder %s75, %s76
      %p90 = scmp.eq.s32.totalorder %s17, 3
      %p91 = por %p89, %p90
      %p93 = scmp.ne.s32.totalorder %s76, %s92
      %p94 = scmp.eq.s32.totalorder %s17, 0
      %p95 = por %p93, %p94
      %p96 = scmp.le.s32.totalorder 1, %s11
      %p97 = scmp.lt.s32.totalorder %s11, 5
      %p98 = pnand %p96, %p97
      %p99 = pneg %p98
      // Predicated region
      $region9: #{tpu_custom_call.1} parent=5 // pred_check
        _
      $region10: #{tpu_custom_call.1} parent=5 // pred_check_branch
        %101 = sbr.rel (%p98) target = $region12
      $region11: #{tpu_custom_call.1} parent=5 // pred_region
        %s102 = ssub.s32 %s11, 1
      $region12: #{tpu_custom_call.1} parent=5 // pred_fallthru
        _
      %p103 = scmp.lt.s32.totalorder %s11, 4
      // Predicated region
      $region13: #{tpu_custom_call.1} parent=5 // pred_check
        %p104 = pneg %p103
      $region14: #{tpu_custom_call.1} parent=5 // pred_check_branch
        %106 = sbr.rel (%p104) target = $region16
      $region15: #{tpu_custom_call.1} parent=5 // pred_region
        // Predicated region
        $region17: #{tpu_custom_call.1} parent=15 // pred_check
          %p107 = pneg %p54
        $region18: #{tpu_custom_call.1} parent=15 // pred_check_branch
          %109 = sbr.rel (%p107) target = $region20
        $region19: #{tpu_custom_call.1} parent=15 // pred_region
          %s110 = sand.u32 %s44, 1
          %s111 = scalar_lea.sflag [#allocation4], %s110
          %s112 = sand.u32 %s44, 1
          %s113 = smul.addr %s112, 8
          %s114 = scalar_lea.vmem [#allocation3], %s113
          %s115 = smul.u32 2, %s18
          %117 = vsyncadd %s111, 0
          %s118 = sadd.s32 %s19, %s115
          %s119 = smul.addr %s20, 2
          %s120 = sadd.s32 %s118, %s119
          %s121 = smul.addr %s120, 4
          %s122 = scalar_lea.hbm %s0, %s121
          %s123 = sshll.u32 %s122, 4
          %s124 = int_to_ptr.hbm [resolvable:$true] %s123
          %s125 = sshll.u32 %s114, 4
          %s126 = int_to_ptr.vmem [resolvable:$true] %s125
          %131 = dma.hbm_to_vmem [thread:$0]  %s124, 128, %s126, %s111, 64, 64, 4
        $region20: #{tpu_custom_call.1} parent=15 // pred_fallthru
          _
      $region16: #{tpu_custom_call.1} parent=5 // pred_fallthru
        _
      %p132 = scmp.le.s32.totalorder 1, %s11
      %p133 = scmp.lt.s32.totalorder %s11, 5
      %p134 = pnand %p132, %p133
      %p135 = pneg %p134
      // Predicated region
      $region21: #{tpu_custom_call.1} parent=5 // pred_check
        _
      $region22: #{tpu_custom_call.1} parent=5 // pred_check_branch
        %137 = sbr.rel (%p134) target = $region24
      $region23: #{tpu_custom_call.1} parent=5 // pred_region
        %s138 = ssub.s32 %s11, 1
        %s139 = sand.u32 %s47, 1
        %s140 = scalar_lea.sflag [#allocation4], %s139
        %s141 = sand.u32 %s47, 1
        %s142 = smul.addr %s141, 8
        %s143 = scalar_lea.vmem [#allocation3], %s142
        // Predicated region
        $region25: #{tpu_custom_call.1} parent=23 // pred_check
          %p144 = pneg %p60
        $region26: #{tpu_custom_call.1} parent=23 // pred_check_branch
          %146 = sbr.rel (%p144) target = $region28
        $region27: #{tpu_custom_call.1} parent=23 // pred_region
          %148 = dma.done %s140, 128
        $region28: #{tpu_custom_call.1} parent=23 // pred_fallthru
          _
        %s149 = sand.u32 %s47, 1
        %s150 = scalar_lea.sflag [#allocation4], %s149
        %s151 = sand.u32 %s47, 1
        %s152 = smul.addr %s151, 8
        %s153 = scalar_lea.vmem [#allocation3], %s152
        %p154 = pneg %p60
        %p155 = pneg %p57
        %p156 = pneg %p88
        %p157 = pneg %p85
        %s158 = smul.u32 2, %s21
        %s159 = smul.u32 2, %s21
        %v160 = vld [vmem:[%s143] sm:$0xf]
        %v161 = vld [vmem:[%s143 + $0x4] sm:$0xf]
        %v162 = vunpack.c.l.bf16 %v160
        %v163 = vunpack.c.l.bf16 %v161
        %p164 = scmp.eq.s32.totalorder %s23, 0
        // Predicated region
        $region29: #{tpu_custom_call.1} parent=23 // pred_check
          %p165 = pneg %p164
        $region30: #{tpu_custom_call.1} parent=23 // pred_check_branch
          %167 = sbr.rel (%p165) target = $region32
        $region31: #{tpu_custom_call.1} parent=23 // pred_region
          %vm168 = vcmask 261120
          %169 = vst.msk [vmem:[#allocation2] sm:$0xff] %vm168, %v162
          %170 = vst.msk [vmem:[#allocation2 + $0x8] sm:$0xff] %vm168, %v163
        $region32: #{tpu_custom_call.1} parent=23 // pred_fallthru
          _
        %p171 = scmp.ne.s32.totalorder %s23, 0
        // Predicated region
        $region33: #{tpu_custom_call.1} parent=23 // pred_check
          %p172 = pneg %p171
        $region34: #{tpu_custom_call.1} parent=23 // pred_check_branch
          %174 = sbr.rel (%p172) target = $region36
        $region35: #{tpu_custom_call.1} parent=23 // pred_region
          %v175 = vld [vmem:[#allocation2] sm:$0xff]
          %v176 = vld [vmem:[#allocation2 + $0x8] sm:$0xff]
          %v177 = vadd.f32 %v175, %v162
          %v178 = vadd.f32 %v176, %v163
          %vm179 = vcmask 261120
          %180 = vst.msk [vmem:[#allocation2] sm:$0xff] %vm179, %v177
          %181 = vst.msk [vmem:[#allocation2 + $0x8] sm:$0xff] %vm179, %v178
        $region36: #{tpu_custom_call.1} parent=23 // pred_fallthru
          _
        %p182 = scmp.eq.s32.totalorder %s23, 3
        // Predicated region
        $region37: #{tpu_custom_call.1} parent=23 // pred_check
          %p183 = pneg %p182
        $region38: #{tpu_custom_call.1} parent=23 // pred_check_branch
          %185 = sbr.rel (%p183) target = $region40
        $region39: #{tpu_custom_call.1} parent=23 // pred_region
          %v186 = vld [vmem:[#allocation2] sm:$0xff]
          %v187 = vld [vmem:[#allocation2 + $0x8] sm:$0xff]
          %v188 = vpack.c.bf16 %v186, %v186
          %v189 = vpack.c.bf16 %v187, %v187
          %vm190 = vcmask 257024
          %191 = vst.msk [vmem:[#allocation6] sm:$0xf] %vm190, %v188
          %192 = vst.msk [vmem:[#allocation6 + $0x4] sm:$0xf] %vm190, %v189
        $region40: #{tpu_custom_call.1} parent=23 // pred_fallthru
          _
        // Predicated region
        $region41: #{tpu_custom_call.1} parent=23 // pred_check
          %p193 = pneg %p85
        $region42: #{tpu_custom_call.1} parent=23 // pred_check_branch
          %195 = sbr.rel (%p193) target = $region44
        $region43: #{tpu_custom_call.1} parent=23 // pred_region
          %s196 = smul.u32 2, %s21
          %198 = vsyncadd [#allocation5], 0
          %s199 = sadd.s32 %s22, %s196
          %s200 = smul.addr %s199, 4
          %s201 = scalar_lea.hbm %s1, %s200
          %s202 = sshll.u32 [#allocation6], 4
          %s203 = int_to_ptr.vmem [resolvable:$true] %s202
          %s204 = sshll.u32 %s201, 4
          %s205 = int_to_ptr.hbm [resolvable:$true] %s204
          %210 = dma.vmem_to_hbm [thread:$0]  %s203, 128, %s205, [#allocation5], 64, 64, 4
        $region44: #{tpu_custom_call.1} parent=23 // pred_fallthru
          _
        // Predicated region
        $region45: #{tpu_custom_call.1} parent=23 // pred_check
          %p211 = pneg %p85
        $region46: #{tpu_custom_call.1} parent=23 // pred_check_branch
          %213 = sbr.rel (%p211) target = $region48
        $region47: #{tpu_custom_call.1} parent=23 // pred_region
          %215 = dma.done [#allocation5], 128
        $region48: #{tpu_custom_call.1} parent=23 // pred_fallthru
          _
      $region24: #{tpu_custom_call.1} parent=5 // pred_fallthru
        _
      %p216 = scmp.le.s32.totalorder 2, %s11
      // Predicated region
      $region49: #{tpu_custom_call.1} parent=5 // pred_check
        %p217 = pneg %p216
      $region50: #{tpu_custom_call.1} parent=5 // pred_check_branch
        %219 = sbr.rel (%p217) target = $region52
      $region51: #{tpu_custom_call.1} parent=5 // pred_region
        %s220 = ssub.s32 %s11, 2
      $region52: #{tpu_custom_call.1} parent=5 // pred_fallthru
        _
    $region6: #{tpu_custom_call.1} parent=1 // loop_footer
      %s15 = sadd.s32 1, %s11
    $region7: #{tpu_custom_call.1} parent=1 // loop_footer_branch
      %10 = sbr.rel target = $region3
    $region8: #{tpu_custom_call.1} parent=1 // loop_exit
      _
    %221 = vsyncpa [#allocation4], 1
    %s222 = scalar_lea.sflag [#allocation4], 1
    %223 = vsyncpa %s222, 1
    %224 = vsyncpa [#allocation5], 1
    %s225 = scalar_lea.sflag [#allocation5], 1
    %226 = vsyncpa %s225, 1

</llo_original>
